<compile_context>
chip_gen: v5e
topology: v5e:2x2
jax: 0.10.0
libtpu: 0.0.40
codegen_flags: <defaults>
</compile_context>

<pallas_src>
import functools

import jax
import jax.numpy as jnp
from jax import lax
from jax.experimental import pallas as pl
from jax.experimental.pallas import tpu as pltpu


def _round_up(a, b):
    return pl.cdiv(a, b) * b


def _generator_deep_kernel(xin_ref, wpk_ref, bpk_ref, o_ref, *,
                           d_in, two_h, row_wh, row_wout):
    """One batch tile of the GeneratorDeep forward (inference)."""
    xin = xin_ref[...]                                   # (TILE, d_in) bf16

    # VMEM-resident packed params, unpacked with static, sublane-aligned slices.
    w1p    = wpk_ref[0:d_in, :]                          # (d_in, 2H)  [w1 | 0]
    whp    = wpk_ref[row_wh:row_wh + two_h, :]           # (2H, 2H)    [[w31|w41];[0|0]]
    wout_t = wpk_ref[row_wout:row_wout + 2, :]           # (2, 2H)     [[w32^T|0];[0|w42^T]]
    b_out  = bpk_ref[0:2, 0:1]                           # (2, 1)      [[b32];[b42]]
    b1p    = bpk_ref[2:3, :]                             # (1, 2H)     [b1 | 0]
    bhp    = bpk_ref[3:4, :]                             # (1, 2H)     [b31 | b41]

    # fc1 -- the [x, t, y] concat is already folded into xin's trailing columns
    # by the wrapper; zero-padded weight columns keep cols H:2H exactly 0.
    h1 = jnp.dot(xin, w1p, preferred_element_type=jnp.float32) + b1p
    h1 = jnp.maximum(h1, 0.0)                            # (TILE, 2H) f32

    # Hidden loop: last layer is Dropout -> identity at inference; relu(h1)==h1.
    xh = h1.astype(jnp.bfloat16)

    # Fused heads fc31|fc41: one bf16 MXU matmul, f32 accumulation/bias/relu.
    h = jnp.dot(xh, whp, preferred_element_type=jnp.float32) + bhp
    h = jnp.maximum(h, 0.0)                              # (TILE, 2H) f32

    # Fused fc32|fc42 as a block-diagonal (2, 2H) weight; result produced
    # already transposed (2, TILE) so the store is lane-dense (batch on lanes).
    # (If a Mosaic dump ever shows a vxpose of `h` here, switch to pl.dot with
    #  transpose flags / stationary wout -- per review this is conditional.)
    logits_t = lax.dot_general(
        wout_t, h.astype(jnp.bfloat16),
        dimension_numbers=(((1,), (1,)), ((), ())),
        preferred_element_type=jnp.float32) + b_out      # (2, TILE) f32

    o_ref[...] = jax.nn.sigmoid(logits_t).astype(o_ref.dtype)


def pack_params(params, input_dim, h_dim, *, op_dtype=jnp.bfloat16):
    """Fuse/zero-pad all weights into one bf16 array and biases into one f32
    array (done ONCE outside the kernel). Row offsets are 16-aligned so every
    in-kernel slice is sublane-aligned for bf16."""
    f32 = jnp.float32
    d_in = input_dim + 2
    two_h = 2 * h_dim
    row_wh = int(_round_up(d_in, 16))           # start of the fused-head weight
    row_wout = row_wh + int(_round_up(two_h, 16))  # start of the output weight
    rows = row_wout + 2

    w_pk = jnp.zeros((rows, two_h), f32)
    w_pk = w_pk.at[:d_in, :h_dim].set(params["w1"])                    # [w1 | 0]
    w_pk = w_pk.at[row_wh:row_wh + h_dim, :h_dim].set(params["w31"])   # [w31|w41]
    w_pk = w_pk.at[row_wh:row_wh + h_dim, h_dim:].set(params["w41"])
    w_pk = w_pk.at[row_wout, :h_dim].set(params["w32"][:, 0])          # [w32^T|0]
    w_pk = w_pk.at[row_wout + 1, h_dim:].set(params["w42"][:, 0])      # [0|w42^T]
    w_pk = w_pk.astype(op_dtype)

    b_pk = jnp.zeros((4, two_h), f32)
    b_pk = b_pk.at[0, 0].set(params["b32"][0, 0])
    b_pk = b_pk.at[1, 0].set(params["b42"][0, 0])
    b_pk = b_pk.at[2, :h_dim].set(params["b1"][0])
    b_pk = b_pk.at[3, :].set(
        jnp.concatenate([params["b31"], params["b41"]], axis=1)[0])

    return {"w_pk": w_pk, "b_pk": b_pk,
            "input_dim": input_dim, "h_dim": h_dim,
            "row_wh": row_wh, "row_wout": row_wout}


def generator_deep_forward(x, t, y, packed, *, tile_n=1024):
    """x:(N,D) t:(N,1) y:(N,1) -> (N,2) sigmoid outputs."""
    assert tile_n % 128 == 0, "tile_n must be a multiple of 128"
    n, input_dim = x.shape
    assert input_dim == packed["input_dim"]
    h_dim = packed["h_dim"]
    d_in = input_dim + 2
    two_h = 2 * h_dim
    op_dtype = packed["w_pk"].dtype

    # Tile selection: lane-dense (multiple of 128) output blocks; for small N
    # still emit >=2 grid steps when possible so the v7x second TC isn't idle.
    if n <= tile_n:
        tile = max(128, int(_round_up(pl.cdiv(n, 2), 128)))
    else:
        tile = tile_n
    n_pad = int(_round_up(n, tile))
    grid = (n_pad // tile,)

    # Single marshalling pass: concat [x | t | y], cast to bf16 and row-pad in
    # one fused producer (replaces three separate padded f32 streams and the
    # in-kernel rank-1 t/y updates; bf16 halves the dominant HBM stream).
    xin = jnp.concatenate(
        [x.astype(op_dtype), t.astype(op_dtype), y.astype(op_dtype)], axis=1)
    if n_pad != n:
        xin = jnp.concatenate(
            [xin, jnp.zeros((n_pad - n, d_in), op_dtype)], axis=0)

    kernel = functools.partial(
        _generator_deep_kernel, d_in=d_in, two_h=two_h,
        row_wh=packed["row_wh"], row_wout=packed["row_wout"])

    itemsize = jnp.dtype(op_dtype).itemsize
    cost = pl.CostEstimate(
        flops=2 * n_pad * (d_in * two_h + two_h * two_h + two_h * 2),
        transcendentals=2 * n_pad,
        bytes_accessed=(n_pad * d_in * itemsize + 2 * n_pad * 4
                        + packed["w_pk"].size * itemsize
                        + packed["b_pk"].size * 4),
    )

    out_t = pl.pallas_call(
        kernel,
        out_shape=jax.ShapeDtypeStruct((2, n_pad), jnp.float32),
        grid=grid,
        in_specs=[
            pl.BlockSpec((tile, d_in), lambda i: (i, 0)),           # activations
            pl.BlockSpec(packed["w_pk"].shape, lambda i: (0, 0)),   # resident weights
            pl.BlockSpec(packed["b_pk"].shape, lambda i: (0, 0)),   # resident biases
        ],
        out_specs=pl.BlockSpec((2, tile), lambda i: (0, i)),
        compiler_params=pltpu.CompilerParams(
            dimension_semantics=("parallel",)),
        cost_estimate=cost,
    )(xin, packed["w_pk"], packed["b_pk"])

    return out_t[:, :n].T                                # back to (N, 2)


def init_params(key, input_dim, h_dim):
    """Deterministic xavier-uniform weights (stored (in, out)), zero biases."""
    def xavier(k, fan_in, fan_out):
        bound = (6.0 / (fan_in + fan_out)) ** 0.5
        return jax.random.uniform(k, (fan_in, fan_out), jnp.float32, -bound, bound)

    d_in = input_dim + 2
    k1, k31, k32, k41, k42 = jax.random.split(key, 5)
    return {
        "w1":  xavier(k1,  d_in,  h_dim), "b1":  jnp.zeros((1, h_dim), jnp.float32),
        "w31": xavier(k31, h_dim, h_dim), "b31": jnp.zeros((1, h_dim), jnp.float32),
        "w32": xavier(k32, h_dim, 1),     "b32": jnp.zeros((1, 1),     jnp.float32),
        "w41": xavier(k41, h_dim, h_dim), "b41": jnp.zeros((1, h_dim), jnp.float32),
        "w42": xavier(k42, h_dim, 1),     "b42": jnp.zeros((1, 1),     jnp.float32),
    }


def reference_forward(x, t, y, params):
    """Pure-JAX f32 reference of the PyTorch forward (inference mode)."""
    inputs = jnp.concatenate([x, t, y], axis=1)
    h1 = jax.nn.relu(inputs @ params["w1"] + params["b1"])
    xh = jax.nn.relu(h1)                 # last loop layer = Dropout (identity)
    h31 = jax.nn.relu(xh @ params["w31"] + params["b31"])
    y1 = jax.nn.sigmoid(h31 @ params["w32"] + params["b32"])
    h41 = jax.nn.relu(xh @ params["w41"] + params["b41"])
    y2 = jax.nn.sigmoid(h41 @ params["w42"] + params["b42"])
    return jnp.concatenate([y1, y2], axis=1)


def reference_forward_mixed(x, t, y, params, op_dtype=jnp.bfloat16):
    """Reference with the kernel's numerics: bf16 matmul operands, f32 accum."""
    def mdot(a, b):
        return jnp.dot(a.astype(op_dtype), b.astype(op_dtype),
                       preferred_element_type=jnp.float32)
    inputs = jnp.concatenate([x, t, y], axis=1)
    h1 = jax.nn.relu(mdot(inputs, params["w1"]) + params["b1"])
    xh = h1
    h31 = jax.nn.relu(mdot(xh, params["w31"]) + params["b31"])
    y1 = jax.nn.sigmoid(mdot(h31, params["w32"]) + params["b32"])
    h41 = jax.nn.relu(mdot(xh, params["w41"]) + params["b41"])
    y2 = jax.nn.sigmoid(mdot(h41, params["w42"]) + params["b42"])
    return jnp.concatenate([y1, y2], axis=1)


if __name__ == "__main__":
    # input_dim=30 features, t and y are (N,1) -> fc1 input = 32; h_dim=32.
    # N=384 with the small-N path gives tile=256, grid=(2,) and exercises
    # multi-tile execution plus row padding (512-384 padded rows).
    N, INPUT_DIM, H_DIM = 384, 30, 32

    key = jax.random.PRNGKey(0)
    kx, kt, ky, kp = jax.random.split(key, 4)

    x = jax.random.normal(kx, (N, INPUT_DIM), jnp.float32)
    t = (jax.random.uniform(kt, (N, 1)) > 0.5).astype(jnp.float32)
    y = (jax.random.uniform(ky, (N, 1)) > 0.5).astype(jnp.float32)
    params = init_params(kp, INPUT_DIM, H_DIM)
    packed = pack_params(params, INPUT_DIM, H_DIM)

    out = generator_deep_forward(x, t, y, packed, tile_n=1024)
    out = jax.block_until_ready(out)
    assert out.shape == (N, 2), out.shape

    # Tight check vs a reference with matched (bf16-operand) numerics, plus a
    # looser sanity check vs the exact f32 PyTorch-equivalent forward.
    ref_mixed = reference_forward_mixed(x, t, y, params)
    ref_f32 = reference_forward(x, t, y, params)
    err_mixed = float(jnp.max(jnp.abs(out - ref_mixed)))
    err_f32 = float(jnp.max(jnp.abs(out - ref_f32)))
    assert err_mixed < 2e-3, ("mismatch vs bf16-matched reference", err_mixed)
    assert err_f32 < 1e-1, ("mismatch vs f32 reference", err_f32)

    print("KERNEL_OK")
</pallas_src>

<mosaic_0001>
module attributes {stable_mosaic.version = 11 : i64} {
  func.func @_generator_deep_kernel(%arg0: i32, %arg1: memref<256x32xbf16, #tpu.memory_space<vmem>>, %arg2: memref<98x64xbf16, #tpu.memory_space<vmem>>, %arg3: memref<4x64xf32, #tpu.memory_space<vmem>>, %arg4: memref<2x256xf32, #tpu.memory_space<vmem>>) attributes {dimension_semantics = [#tpu.dimension_semantics<parallel>], iteration_bounds = array<i64: 2>, scalar_prefetch = 0 : i64, scratch_operands = 0 : i64, tpu.core_type = #tpu.core_type<tc>, window_params = [{transform_indices = @transform_0, window_bounds = array<i64: 256, 32>}, {pipeline_mode = #tpu.pipeline_mode<synchronous>, transform_indices = @transform_1, window_bounds = array<i64: 98, 64>}, {pipeline_mode = #tpu.pipeline_mode<synchronous>, transform_indices = @transform_2, window_bounds = array<i64: 4, 64>}, {transform_indices = @transform_3, window_bounds = array<i64: 2, 256>}]} {
    %c0 = arith.constant 0 : index
    %c0_0 = arith.constant 0 : index
    %0 = vector.load %arg1[%c0, %c0_0] : memref<256x32xbf16, #tpu.memory_space<vmem>>, vector<256x32xbf16>
    %c0_1 = arith.constant 0 : index
    %c0_2 = arith.constant 0 : index
    %1 = vector.load %arg2[%c0_1, %c0_2] : memref<98x64xbf16, #tpu.memory_space<vmem>>, vector<32x64xbf16>
    %c32 = arith.constant 32 : index
    %c0_3 = arith.constant 0 : index
    %2 = vector.load %arg2[%c32, %c0_3] : memref<98x64xbf16, #tpu.memory_space<vmem>>, vector<64x64xbf16>
    %c96 = arith.constant 96 : index
    %c0_4 = arith.constant 0 : index
    %3 = vector.load %arg2[%c96, %c0_4] : memref<98x64xbf16, #tpu.memory_space<vmem>>, vector<2x64xbf16>
    %c0_5 = arith.constant 0 : index
    %c0_6 = arith.constant 0 : index
    %4 = vector.load %arg3[%c0_5, %c0_6] : memref<4x64xf32, #tpu.memory_space<vmem>>, vector<2x1xf32>
    %c2 = arith.constant 2 : index
    %c0_7 = arith.constant 0 : index
    %5 = vector.load %arg3[%c2, %c0_7] : memref<4x64xf32, #tpu.memory_space<vmem>>, vector<1x64xf32>
    %c3 = arith.constant 3 : index
    %c0_8 = arith.constant 0 : index
    %6 = vector.load %arg3[%c3, %c0_8] : memref<4x64xf32, #tpu.memory_space<vmem>>, vector<1x64xf32>
    %cst = arith.constant dense<0.000000e+00> : vector<256x64xf32>
    %7 = tpu.matmul %0, %1, %cst {dimension_numbers = #tpu.dot_dimension_numbers<[1], [0], [0], [1], [0, 0, 1, 1], [], []>} : vector<256x32xbf16>, vector<32x64xbf16>, vector<256x64xf32> -> vector<256x64xf32>
    %8 = vector.broadcast %5 : vector<1x64xf32> to vector<256x64xf32>
    %9 = arith.addf %7, %8 : vector<256x64xf32>
    %cst_9 = arith.constant 0.000000e+00 : f32
    %10 = vector.broadcast %cst_9 : f32 to vector<256x64xf32>
    %11 = arith.maximumf %9, %10 : vector<256x64xf32>
    %12 = arith.truncf %11 : vector<256x64xf32> to vector<256x64xbf16>
    %cst_10 = arith.constant dense<0.000000e+00> : vector<256x64xf32>
    %13 = tpu.matmul %12, %2, %cst_10 {dimension_numbers = #tpu.dot_dimension_numbers<[1], [0], [0], [1], [0, 0, 1, 1], [], []>} : vector<256x64xbf16>, vector<64x64xbf16>, vector<256x64xf32> -> vector<256x64xf32>
    %14 = vector.broadcast %6 : vector<1x64xf32> to vector<256x64xf32>
    %15 = arith.addf %13, %14 : vector<256x64xf32>
    %cst_11 = arith.constant 0.000000e+00 : f32
    %16 = vector.broadcast %cst_11 : f32 to vector<256x64xf32>
    %17 = arith.maximumf %15, %16 : vector<256x64xf32>
    %18 = arith.truncf %17 : vector<256x64xf32> to vector<256x64xbf16>
    %cst_12 = arith.constant dense<0.000000e+00> : vector<2x256xf32>
    %19 = tpu.matmul %3, %18, %cst_12 {dimension_numbers = #tpu.dot_dimension_numbers<[1], [1], [0], [0], [0, 0, 1, 0], [], []>} : vector<2x64xbf16>, vector<256x64xbf16>, vector<2x256xf32> -> vector<2x256xf32>
    %20 = vector.broadcast %4 : vector<2x1xf32> to vector<2x256xf32>
    %21 = arith.addf %19, %20 : vector<2x256xf32>
    %22 = arith.negf %21 : vector<2x256xf32>
    %23 = math.exp %22 : vector<2x256xf32>
    %cst_13 = arith.constant 1.000000e+00 : f32
    %24 = vector.broadcast %cst_13 : f32 to vector<2x256xf32>
    %25 = arith.addf %24, %23 : vector<2x256xf32>
    %26 = arith.divf %24, %25 : vector<2x256xf32>
    %c0_14 = arith.constant 0 : index
    %c0_15 = arith.constant 0 : index
    %27 = vector.load %arg4[%c0_14, %c0_15] : memref<2x256xf32, #tpu.memory_space<vmem>>, vector<2x256xf32>
    tpu.vector_store %arg4[%c0_14, %c0_15], %26 {strides = array<i32>} : memref<2x256xf32, #tpu.memory_space<vmem>>, vector<2x256xf32>,
    return
  }
  func.func @transform_0(%arg0: i32) -> (i32, i32) {
    %c0_i32 = arith.constant 0 : i32
    %c0_i32_0 = arith.constant 0 : i32
    return %arg0, %c0_i32 : i32, i32
  }
  func.func @transform_1(%arg0: i32) -> (i32, i32) {
    %c0_i32 = arith.constant 0 : i32
    %c0_i32_0 = arith.constant 0 : i32
    %c0_i32_1 = arith.constant 0 : i32
    return %c0_i32, %c0_i32_0 : i32, i32
  }
  func.func @transform_2(%arg0: i32) -> (i32, i32) {
    %c0_i32 = arith.constant 0 : i32
    %c0_i32_0 = arith.constant 0 : i32
    %c0_i32_1 = arith.constant 0 : i32
    return %c0_i32, %c0_i32_0 : i32, i32
  }
  func.func @transform_3(%arg0: i32) -> (i32, i32) {
    %c0_i32 = arith.constant 0 : i32
    %c0_i32_0 = arith.constant 0 : i32
    return %c0_i32, %arg0 : i32, i32
  }
}

</mosaic_0001>

<llo_original>
// kernel: tpu_custom_call.1
$region0: #{tpu_custom_call.1}
  #allocation0 [shape = 'u32[]', space=smem, size = 0x4, offset = 0x4, fixed_abs, tag = 'smem constant byte address 0x4 - core index']
  #allocation1 [shape = 'u32[72,128]{1,0:T(1,128)}', space=vmem, size = 0x9000, scoped, tag = 'internal scratch']
  %s0 = inlined_call_operand.vmem [shape: bf16[512,32], index: 0, kind: input, shape index: {}]
  %s1 = inlined_call_operand.vmem [shape: bf16[98,64], index: 1, kind: input, shape index: {}]
  %s2 = inlined_call_operand.vmem [shape: f32[4,64], index: 2, kind: input, shape index: {}]
  %s3 = inlined_call_operand.hbm [shape: f32[2,512], index: 3, kind: output, shape index: {}]
  %s4 = sld [smem:[#allocation0]]
  $region45: #{tpu_custom_call.1} parent=0
    _
  %s6 = ssub.s32 1, %s4
  %s7 = scalar_select 0, %s6, %s4
  $region1: #{tpu_custom_call.1} parent=0
    #allocation2 [shape = 'u8[4096]{0}', space=vmem, size = 0x1000, scoped, tag = 'output window, operand 0']
    #allocation3 [shape = 's32[2]{0}', space=sflag, size = 0x8, scoped, tag = 'scoped memory for tpu_custom_call.1']
    %8 = vsyncpa [#allocation3], 0
    %s9 = scalar_lea.sflag [#allocation3], 1
    %10 = vsyncpa %s9, 0
    loop: start=0, step=1, limit=4
    $region2: #{tpu_custom_call.1} parent=1 // loop_pre_header
      _
    $region3: #{tpu_custom_call.1} parent=1 // loop_header
      %s12 = sphi 0, %s16
      %p13 = scmp.ge.s32.totalorder %s12, 4
      %s22 = sphi 0, %s24
      %s25 = sphi 0, %s22
      %s26 = sphi 0, %s25
      %s42 = sphi 0, %s26
      %s46 = sphi 0, %s46
      %s48 = sphi 0, %s46
      %s49 = sphi 0, %s48
      %s63 = sphi 0, %s49
      %s67 = sphi 0, %s67
      %s69 = sphi 0, %s67
      %s70 = sphi 0, %s69
      %s84 = sphi 0, %s70
      %s90 = sphi 0, %s92
      %s93 = sphi 0, %s90
      %s94 = sphi 0, %s93
      %s110 = sphi 0, %s94
    $region4: #{tpu_custom_call.1} parent=1 // loop_header_branch
      %15 = sbr.rel (%p13) target = $region8
    $region5: #{tpu_custom_call.1} parent=1 // loop_body
      %s17 = ssub.s32 %s12, 1
      %s18 = ssub.s32 %s12, 2
      %s19 = sadd.s32 %s12, 1
      %s20 = ssub.s32 %s12, %s19
      %p21 = scmp.eq.s32.totalorder %s20, 0
      %s23 = sadd.s32 %s22, 1
      %s24 = scalar_select %p21, %s22, %s23
      %p27 = pneg %p21
      %p28 = scmp.eq.s32.totalorder %s12, 1
      %p29 = por %p27, %p28
      %p30 = scmp.ne.s32.totalorder %s22, %s25
      %p31 = scmp.eq.s32.totalorder %s12, 0
      %p32 = por %p30, %p31
      %p33 = scmp.ne.s32.totalorder %s22, %s25
      %p34 = scmp.eq.s32.totalorder %s17, 1
      %p35 = por %p33, %p34
      %p36 = scmp.ne.s32.totalorder %s25, %s26
      %p37 = scmp.eq.s32.totalorder %s17, 0
      %p38 = por %p36, %p37
      %p39 = scmp.ne.s32.totalorder %s25, %s26
      %p40 = scmp.eq.s32.totalorder %s18, 1
      %p41 = por %p39, %p40
      %p43 = scmp.ne.s32.totalorder %s26, %s42
      %p44 = scmp.eq.s32.totalorder %s18, 0
      %p45 = por %p43, %p44
      %s47 = sadd.s32 %s46, 1
      %p50 = scmp.eq.s32.totalorder %s12, 1
      %p51 = scmp.ne.s32.totalorder %s46, %s48
      %p52 = scmp.eq.s32.totalorder %s12, 0
      %p53 = por %p51, %p52
      %p54 = scmp.ne.s32.totalorder %s46, %s48
      %p55 = scmp.eq.s32.totalorder %s17, 1
      %p56 = por %p54, %p55
      %p57 = scmp.ne.s32.totalorder %s48, %s49
      %p58 = scmp.eq.s32.totalorder %s17, 0
      %p59 = por %p57, %p58
      %p60 = scmp.ne.s32.totalorder %s48, %s49
      %p61 = scmp.eq.s32.totalorder %s18, 1
      %p62 = por %p60, %p61
      %p64 = scmp.ne.s32.totalorder %s49, %s63
      %p65 = scmp.eq.s32.totalorder %s18, 0
      %p66 = por %p64, %p65
      %s68 = sadd.s32 %s67, 1
      %p71 = scmp.eq.s32.totalorder %s12, 1
      %p72 = scmp.ne.s32.totalorder %s67, %s69
      %p73 = scmp.eq.s32.totalorder %s12, 0
      %p74 = por %p72, %p73
      %p75 = scmp.ne.s32.totalorder %s67, %s69
      %p76 = scmp.eq.s32.totalorder %s17, 1
      %p77 = por %p75, %p76
      %p78 = scmp.ne.s32.totalorder %s69, %s70
      %p79 = scmp.eq.s32.totalorder %s17, 0
      %p80 = por %p78, %p79
      %p81 = scmp.ne.s32.totalorder %s69, %s70
      %p82 = scmp.eq.s32.totalorder %s18, 1
      %p83 = por %p81, %p82
      %p85 = scmp.ne.s32.totalorder %s70, %s84
      %p86 = scmp.eq.s32.totalorder %s18, 0
      %p87 = por %p85, %p86
      %s88 = ssub.s32 %s12, %s19
      %p89 = scmp.eq.s32.totalorder %s88, 0
      %s91 = sadd.s32 %s90, 1
      %s92 = scalar_select %p89, %s90, %s91
      %p95 = pneg %p89
      %p96 = scmp.eq.s32.totalorder %s12, 1
      %p97 = por %p95, %p96
      %p98 = scmp.ne.s32.totalorder %s90, %s93
      %p99 = scmp.eq.s32.totalorder %s12, 0
      %p100 = por %p98, %p99
      %p101 = scmp.ne.s32.totalorder %s90, %s93
      %p102 = scmp.eq.s32.totalorder %s17, 1
      %p103 = por %p101, %p102
      %p104 = scmp.ne.s32.totalorder %s93, %s94
      %p105 = scmp.eq.s32.totalorder %s17, 0
      %p106 = por %p104, %p105
      %p107 = scmp.ne.s32.totalorder %s93, %s94
      %p108 = scmp.eq.s32.totalorder %s18, 1
      %p109 = por %p107, %p108
      %p111 = scmp.ne.s32.totalorder %s94, %s110
      %p112 = scmp.eq.s32.totalorder %s18, 0
      %p113 = por %p111, %p112
      %p114 = scmp.le.s32.totalorder 1, %s12
      %p115 = scmp.lt.s32.totalorder %s12, 3
      %p116 = pnand %p114, %p115
      %p117 = pneg %p116
      // Predicated region
      $region9: #{tpu_custom_call.1} parent=5 // pred_check
        _
      $region10: #{tpu_custom_call.1} parent=5 // pred_check_branch
        %119 = sbr.rel (%p116) target = $region12
      $region11: #{tpu_custom_call.1} parent=5 // pred_region
        %s120 = ssub.s32 %s12, 1
        // Predicated region
        $region13: #{tpu_custom_call.1} parent=11 // pred_check
          %p121 = pneg %p59
        $region14: #{tpu_custom_call.1} parent=11 // pred_check_branch
          %123 = sbr.rel (%p121) target = $region16
        $region15: #{tpu_custom_call.1} parent=11 // pred_region
          _
        $region16: #{tpu_custom_call.1} parent=11 // pred_fallthru
          _
        // Predicated region
        $region17: #{tpu_custom_call.1} parent=11 // pred_check
          %p124 = pneg %p80
        $region18: #{tpu_custom_call.1} parent=11 // pred_check_branch
          %126 = sbr.rel (%p124) target = $region20
        $region19: #{tpu_custom_call.1} parent=11 // pred_region
          _
        $region20: #{tpu_custom_call.1} parent=11 // pred_fallthru
          _
      $region12: #{tpu_custom_call.1} parent=5 // pred_fallthru
        _
      %p127 = scmp.lt.s32.totalorder %s12, 2
      // Predicated region
      $region21: #{tpu_custom_call.1} parent=5 // pred_check
        %p128 = pneg %p127
      $region22: #{tpu_custom_call.1} parent=5 // pred_check_branch
        %130 = sbr.rel (%p128) target = $region24
      $region23: #{tpu_custom_call.1} parent=5 // pred_region
        // Predicated region
        $region25: #{tpu_custom_call.1} parent=23 // pred_check
          %p131 = pneg %p32
        $region26: #{tpu_custom_call.1} parent=23 // pred_check_branch
          %133 = sbr.rel (%p131) target = $region28
        $region27: #{tpu_custom_call.1} parent=23 // pred_region
          %s134 = smul.u32 32, %s12
          %p135 = scmp.lt.s32.totalorder %s134, 63
          %s136 = scalar_select %p135, %s134, 63
          %s137 = smul.addr %s136, 4
          %s138 = scalar_lea.vmem %s0, %s137
          %s139 = smul.u32 32, %s12
        $region28: #{tpu_custom_call.1} parent=23 // pred_fallthru
          _
      $region24: #{tpu_custom_call.1} parent=5 // pred_fallthru
        _
      %p140 = scmp.le.s32.totalorder 1, %s12
      %p141 = scmp.lt.s32.totalorder %s12, 3
      %p142 = pnand %p140, %p141
      %p143 = pneg %p142
      // Predicated region
      $region29: #{tpu_custom_call.1} parent=5 // pred_check
        _
      $region30: #{tpu_custom_call.1} parent=5 // pred_check_branch
        %145 = sbr.rel (%p142) target = $region32
      $region31: #{tpu_custom_call.1} parent=5 // pred_region
        %s146 = ssub.s32 %s12, 1
        %s147 = smul.u32 32, %s17
        %p148 = scmp.lt.s32.totalorder %s147, 63
        %s149 = scalar_select %p148, %s147, 63
        %s150 = smul.addr %s149, 4
        %s151 = scalar_lea.vmem %s0, %s150
        %p152 = pneg %p38
        %p153 = pneg %p35
        %p154 = pneg %p59
        %p155 = pneg %p56
        %p156 = pneg %p80
        %p157 = pneg %p77
        %p158 = pneg %p106
        %p159 = pneg %p103
        %s160 = sand.u32 %s93, 1
        %s161 = scalar_lea.sflag [#allocation3], %s160
        %s162 = sand.u32 %s93, 1
        %s163 = smul.addr %s162, 4
        %s164 = scalar_lea.vmem [#allocation2], %s163
        %s165 = smul.u32 32, %s17
        %p166 = scmp.lt.s32.totalorder %s165, 63
        %s167 = scalar_select %p166, %s165, 63
        %s168 = smul.addr %s167, 4
        %s169 = scalar_lea.vmem %s0, %s168
        %s170 = smul.u32 32, %s17
        %s171 = smul.u32 2, %s17
        %v173 = vld [vmem:[%s169] sm:$0xf]
        %v174 = vld [vmem:[%s169 + $0x4] sm:$0xf]
        %v175 = vld [vmem:[%s169 + $0x8] sm:$0xf]
        %v176 = vld [vmem:[%s169 + $0xc] sm:$0xf]
        %v177 = vld [vmem:[%s169 + $0x10] sm:$0xf]
        %v178 = vld [vmem:[%s169 + $0x14] sm:$0xf]
        %v179 = vld [vmem:[%s169 + $0x18] sm:$0xf]
        %v180 = vld [vmem:[%s169 + $0x1c] sm:$0xf]
        %v181 = vld [vmem:[%s169 + $0x20] sm:$0xf]
        %v182 = vld [vmem:[%s169 + $0x24] sm:$0xf]
        %v183 = vld [vmem:[%s169 + $0x28] sm:$0xf]
        %v184 = vld [vmem:[%s169 + $0x2c] sm:$0xf]
        %v185 = vld [vmem:[%s169 + $0x30] sm:$0xf]
        %v186 = vld [vmem:[%s169 + $0x34] sm:$0xf]
        %v187 = vld [vmem:[%s169 + $0x38] sm:$0xf]
        %v188 = vld [vmem:[%s169 + $0x3c] sm:$0xf]
        %v189 = vld [vmem:[%s169 + $0x40] sm:$0xf]
        %v190 = vld [vmem:[%s169 + $0x44] sm:$0xf]
        %v191 = vld [vmem:[%s169 + $0x48] sm:$0xf]
        %v192 = vld [vmem:[%s169 + $0x4c] sm:$0xf]
        %v193 = vld [vmem:[%s169 + $0x50] sm:$0xf]
        %v194 = vld [vmem:[%s169 + $0x54] sm:$0xf]
        %v195 = vld [vmem:[%s169 + $0x58] sm:$0xf]
        %v196 = vld [vmem:[%s169 + $0x5c] sm:$0xf]
        %v197 = vld [vmem:[%s169 + $0x60] sm:$0xf]
        %v198 = vld [vmem:[%s169 + $0x64] sm:$0xf]
        %v199 = vld [vmem:[%s169 + $0x68] sm:$0xf]
        %v200 = vld [vmem:[%s169 + $0x6c] sm:$0xf]
        %v201 = vld [vmem:[%s169 + $0x70] sm:$0xf]
        %v202 = vld [vmem:[%s169 + $0x74] sm:$0xf]
        %v203 = vld [vmem:[%s169 + $0x78] sm:$0xf]
        %v204 = vld [vmem:[%s169 + $0x7c] sm:$0xf]
        %v205 = vld [vmem:[%s1] sm:$0xf]
        %v206 = vld [vmem:[%s1 + $0x4] sm:$0xf]
        %v207 = vld [vmem:[%s1 + $0x8] sm:$0xf]
        %v208 = vld [vmem:[%s1 + $0xc] sm:$0xf]
        %v209 = vld [vmem:[%s1 + $0x10] sm:$0xf]
        %v210 = vld [vmem:[%s1 + $0x14] sm:$0xf]
        %v211 = vld [vmem:[%s1 + $0x18] sm:$0xf]
        %v212 = vld [vmem:[%s1 + $0x1c] sm:$0xf]
        %v213 = vld [vmem:[%s1 + $0x20] sm:$0xf]
        %v214 = vld [vmem:[%s1 + $0x24] sm:$0xf]
        %v215 = vld [vmem:[%s1 + $0x28] sm:$0xf]
        %v216 = vld [vmem:[%s1 + $0x2c] sm:$0xf]
        %v217 = vld [vmem:[%s1 + $0x30] sm:$0x1]
        %v218 = vld [vmem:[%s2] sm:$0x3]
        %v219 = vld [vmem:[%s2 + $0x2] sm:$0x1]
        %v220 = vld [vmem:[%s2 + $0x3] sm:$0x1]
        %v221 = vperm.slane %v219, 0
        %v254 = vunpack.c.l.b16 %v173
        %v255 = vunpack.c.l.b16 %v174
        %v256 = vunpack.c.l.b16 %v175
        %v257 = vunpack.c.l.b16 %v176
        %v258 = vunpack.c.l.b16 %v177
        %v259 = vunpack.c.l.b16 %v178
        %v260 = vunpack.c.l.b16 %v179
        %v261 = vunpack.c.l.b16 %v180
        %v262 = vunpack.c.l.b16 %v181
        %v263 = vunpack.c.l.b16 %v182
        %v264 = vunpack.c.l.b16 %v183
        %v265 = vunpack.c.l.b16 %v184
        %v266 = vunpack.c.l.b16 %v185
        %v267 = vunpack.c.l.b16 %v186
        %v268 = vunpack.c.l.b16 %v187
        %v269 = vunpack.c.l.b16 %v188
        %v270 = vunpack.c.l.b16 %v189
        %v271 = vunpack.c.l.b16 %v190
        %v272 = vunpack.c.l.b16 %v191
        %v273 = vunpack.c.l.b16 %v192
        %v274 = vunpack.c.l.b16 %v193
        %v275 = vunpack.c.l.b16 %v194
        %v276 = vunpack.c.l.b16 %v195
        %v277 = vunpack.c.l.b16 %v196
        %v278 = vunpack.c.l.b16 %v197
        %v279 = vunpack.c.l.b16 %v198
        %v280 = vunpack.c.l.b16 %v199
        %v281 = vunpack.c.l.b16 %v200
        %v282 = vunpack.c.l.b16 %v201
        %v283 = vunpack.c.l.b16 %v202
        %v284 = vunpack.c.l.b16 %v203
        %v285 = vunpack.c.l.b16 %v204
        %v286 = vpack.c.b16 %v255, %v254
        %v287 = vpack.c.b16 %v257, %v256
        %v288 = vpack.c.b16 %v259, %v258
        %v289 = vpack.c.b16 %v261, %v260
        %v290 = vpack.c.b16 %v263, %v262
        %v291 = vpack.c.b16 %v265, %v264
        %v292 = vpack.c.b16 %v267, %v266
        %v293 = vpack.c.b16 %v269, %v268
        %v294 = vpack.c.b16 %v271, %v270
        %v295 = vpack.c.b16 %v273, %v272
        %v296 = vpack.c.b16 %v275, %v274
        %v297 = vpack.c.b16 %v277, %v276
        %v298 = vpack.c.b16 %v279, %v278
        %v299 = vpack.c.b16 %v281, %v280
        %v300 = vpack.c.b16 %v283, %v282
        %v301 = vpack.c.b16 %v285, %v284
        %v306 = vunpack.c.l.b16 %v205
        %v307 = vunpack.c.l.b16 %v206
        %v308 = vunpack.c.l.b16 %v207
        %v309 = vunpack.c.l.b16 %v208
        %v310 = vpack.c.b16 %v307, %v306
        %v311 = vpack.c.b16 %v309, %v308
        %vm314 = vcmask 261120
        %v316 = vsel %vm314, %v286, 0
        %v319 = vsel %vm314, %v287, 0
        %v322 = vsel %vm314, %v288, 0
        %v325 = vsel %vm314, %v289, 0
        %v328 = vsel %vm314, %v290, 0
        %v331 = vsel %vm314, %v291, 0
        %v334 = vsel %vm314, %v292, 0
        %v337 = vsel %vm314, %v293, 0
        %v340 = vsel %vm314, %v294, 0
        %v343 = vsel %vm314, %v295, 0
        %v346 = vsel %vm314, %v296, 0
        %v349 = vsel %vm314, %v297, 0
        %v352 = vsel %vm314, %v298, 0
        %v355 = vsel %vm314, %v299, 0
        %v358 = vsel %vm314, %v300, 0
        %v361 = vsel %vm314, %v301, 0
        %363 = vmatpush.bf16.msra.mxu0 0
        %364 = vmatpush.bf16.msra.mxu0 0
        %365 = vmatpush.bf16.msra.mxu0 0
        %366 = vmatpush.bf16.msra.mxu0 0
        %367 = vmatpush.bf16.msra.mxu0 0
        %368 = vmatpush.bf16.msra.mxu0 0
        %369 = vmatpush.bf16.msra.mxu0 %v311
        %370 = vmatpush.bf16.msra.mxu0 %v310
        %371 = vmatmul.bf16.gmra.mxu0 %v316
        %v372 = vpop.f32.mrf.mxu0
        %v373 = vadd.f32 %v221, %v372
        %v374 = vpop.f32.mrf.mxu0
        %v375 = vadd.f32 %v221, %v374
        %376 = vmatmul.bf16.gmra.mxu0 %v319
        %v377 = vpop.f32.mrf.mxu0
        %v378 = vadd.f32 %v221, %v377
        %v379 = vpop.f32.mrf.mxu0
        %v380 = vadd.f32 %v221, %v379
        %381 = vmatmul.bf16.gmra.mxu0 %v322
        %v382 = vpop.f32.mrf.mxu0
        %v383 = vadd.f32 %v221, %v382
        %v384 = vpop.f32.mrf.mxu0
        %v385 = vadd.f32 %v221, %v384
        %386 = vmatmul.bf16.gmra.mxu0 %v325
        %v387 = vpop.f32.mrf.mxu0
        %v388 = vadd.f32 %v221, %v387
        %v389 = vpop.f32.mrf.mxu0
        %v390 = vadd.f32 %v221, %v389
        %391 = vmatmul.bf16.gmra.mxu0 %v328
        %v392 = vpop.f32.mrf.mxu0
        %v393 = vadd.f32 %v221, %v392
        %v394 = vpop.f32.mrf.mxu0
        %v395 = vadd.f32 %v221, %v394
        %396 = vmatmul.bf16.gmra.mxu0 %v331
        %v397 = vpop.f32.mrf.mxu0
        %v398 = vadd.f32 %v221, %v397
        %v399 = vpop.f32.mrf.mxu0
        %v400 = vadd.f32 %v221, %v399
        %401 = vmatmul.bf16.gmra.mxu0 %v334
        %v402 = vpop.f32.mrf.mxu0
        %v403 = vadd.f32 %v221, %v402
        %v404 = vpop.f32.mrf.mxu0
        %v405 = vadd.f32 %v221, %v404
        %406 = vmatmul.bf16.gmra.mxu0 %v337
        %v407 = vpop.f32.mrf.mxu0
        %v408 = vadd.f32 %v221, %v407
        %v409 = vpop.f32.mrf.mxu0
        %v410 = vadd.f32 %v221, %v409
        %411 = vmatmul.bf16.gmra.mxu0 %v340
        %v412 = vpop.f32.mrf.mxu0
        %v413 = vadd.f32 %v221, %v412
        %v414 = vpop.f32.mrf.mxu0
        %v415 = vadd.f32 %v221, %v414
        %416 = vmatmul.bf16.gmra.mxu0 %v343
        %v417 = vpop.f32.mrf.mxu0
        %v418 = vadd.f32 %v221, %v417
        %v419 = vpop.f32.mrf.mxu0
        %v420 = vadd.f32 %v221, %v419
        %421 = vmatmul.bf16.gmra.mxu0 %v346
        %v422 = vpop.f32.mrf.mxu0
        %v423 = vadd.f32 %v221, %v422
        %v424 = vpop.f32.mrf.mxu0
        %v425 = vadd.f32 %v221, %v424
        %426 = vmatmul.bf16.gmra.mxu0 %v349
        %v427 = vpop.f32.mrf.mxu0
        %v428 = vadd.f32 %v221, %v427
        %v429 = vpop.f32.mrf.mxu0
        %v430 = vadd.f32 %v221, %v429
        %431 = vmatmul.bf16.gmra.mxu0 %v352
        %v432 = vpop.f32.mrf.mxu0
        %v433 = vadd.f32 %v221, %v432
        %v434 = vpop.f32.mrf.mxu0
        %v435 = vadd.f32 %v221, %v434
        %436 = vmatmul.bf16.gmra.mxu0 %v355
        %v437 = vpop.f32.mrf.mxu0
        %v438 = vadd.f32 %v221, %v437
        %v439 = vpop.f32.mrf.mxu0
        %v440 = vadd.f32 %v221, %v439
        %441 = vmatmul.bf16.gmra.mxu0 %v358
        %v442 = vpop.f32.mrf.mxu0
        %v443 = vadd.f32 %v221, %v442
        %v444 = vpop.f32.mrf.mxu0
        %v445 = vadd.f32 %v221, %v444
        %446 = vmatmul.bf16.gmra.mxu0 %v361
        %v447 = vpop.f32.mrf.mxu0
        %v448 = vadd.f32 %v221, %v447
        %v449 = vpop.f32.mrf.mxu0
        %v450 = vadd.f32 %v221, %v449
        %451 = vdwg.mxu0
        %v452 = vmax.f32 %v373, 0.0
        %v453 = vmax.f32 %v375, 0.0
        %v454 = vmax.f32 %v378, 0.0
        %v455 = vmax.f32 %v380, 0.0
        %v456 = vmax.f32 %v383, 0.0
        %v457 = vmax.f32 %v385, 0.0
        %v458 = vmax.f32 %v388, 0.0
        %v459 = vmax.f32 %v390, 0.0
        %v460 = vmax.f32 %v393, 0.0
        %v461 = vmax.f32 %v395, 0.0
        %v462 = vmax.f32 %v398, 0.0
        %v463 = vmax.f32 %v400, 0.0
        %v464 = vmax.f32 %v403, 0.0
        %v465 = vmax.f32 %v405, 0.0
        %v466 = vmax.f32 %v408, 0.0
        %v467 = vmax.f32 %v410, 0.0
        %v468 = vmax.f32 %v413, 0.0
        %v469 = vmax.f32 %v415, 0.0
        %v470 = vmax.f32 %v418, 0.0
        %v471 = vmax.f32 %v420, 0.0
        %v472 = vmax.f32 %v423, 0.0
        %v473 = vmax.f32 %v425, 0.0
        %v474 = vmax.f32 %v428, 0.0
        %v475 = vmax.f32 %v430, 0.0
        %v476 = vmax.f32 %v433, 0.0
        %v477 = vmax.f32 %v435, 0.0
        %v478 = vmax.f32 %v438, 0.0
        %v479 = vmax.f32 %v440, 0.0
        %v480 = vmax.f32 %v443, 0.0
        %v481 = vmax.f32 %v445, 0.0
        %v482 = vmax.f32 %v448, 0.0
        %v483 = vmax.f32 %v450, 0.0
        %v484 = vpack.c.bf16 %v453, %v452
        %v485 = vpack.c.bf16 %v455, %v454
        %v486 = vpack.c.bf16 %v457, %v456
        %v487 = vpack.c.bf16 %v459, %v458
        %v488 = vpack.c.bf16 %v461, %v460
        %v489 = vpack.c.bf16 %v463, %v462
        %v490 = vpack.c.bf16 %v465, %v464
        %v491 = vpack.c.bf16 %v467, %v466
        %v492 = vpack.c.bf16 %v469, %v468
        %v493 = vpack.c.bf16 %v471, %v470
        %v494 = vpack.c.bf16 %v473, %v472
        %v495 = vpack.c.bf16 %v475, %v474
        %v496 = vpack.c.bf16 %v477, %v476
        %v497 = vpack.c.bf16 %v479, %v478
        %v498 = vpack.c.bf16 %v481, %v480
        %v499 = vpack.c.bf16 %v483, %v482
        %v500 = vperm.slane %v220, 0
        %v509 = vunpack.c.l.b16 %v209
        %v510 = vunpack.c.l.b16 %v210
        %v511 = vunpack.c.l.b16 %v211
        %v512 = vunpack.c.l.b16 %v212
        %v513 = vunpack.c.l.b16 %v213
        %v514 = vunpack.c.l.b16 %v214
        %v515 = vunpack.c.l.b16 %v215
        %v516 = vunpack.c.l.b16 %v216
        %v517 = vpack.c.b16 %v510, %v509
        %v518 = vpack.c.b16 %v512, %v511
        %v519 = vpack.c.b16 %v514, %v513
        %v520 = vpack.c.b16 %v516, %v515
        %vm525 = vcmask 523264
        %v527 = vsel %vm525, %v484, 0
        %v530 = vsel %vm525, %v485, 0
        %v533 = vsel %vm525, %v486, 0
        %v536 = vsel %vm525, %v487, 0
        %v539 = vsel %vm525, %v488, 0
        %v542 = vsel %vm525, %v489, 0
        %v545 = vsel %vm525, %v490, 0
        %v548 = vsel %vm525, %v491, 0
        %v551 = vsel %vm525, %v492, 0
        %v554 = vsel %vm525, %v493, 0
        %v557 = vsel %vm525, %v494, 0
        %v560 = vsel %vm525, %v495, 0
        %v563 = vsel %vm525, %v496, 0
        %v566 = vsel %vm525, %v497, 0
        %v569 = vsel %vm525, %v498, 0
        %v572 = vsel %vm525, %v499, 0
        %574 = vmatpush.bf16.msra.mxu0 0
        %575 = vmatpush.bf16.msra.mxu0 0
        %576 = vmatpush.bf16.msra.mxu0 0
        %577 = vmatpush.bf16.msra.mxu0 0
        %578 = vmatpush.bf16.msra.mxu0 %v520
        %579 = vmatpush.bf16.msra.mxu0 %v519
        %580 = vmatpush.bf16.msra.mxu0 %v518
        %581 = vmatpush.bf16.msra.mxu0 %v517
        %582 = vmatmul.bf16.gmra.mxu0 %v527
        %v583 = vpop.f32.mrf.mxu0
        %v584 = vadd.f32 %v500, %v583
        %v585 = vpop.f32.mrf.mxu0
        %v586 = vadd.f32 %v500, %v585
        %587 = vmatmul.bf16.gmra.mxu0 %v530
        %v588 = vpop.f32.mrf.mxu0
        %v589 = vadd.f32 %v500, %v588
        %v590 = vpop.f32.mrf.mxu0
        %v591 = vadd.f32 %v500, %v590
        %592 = vmatmul.bf16.gmra.mxu0 %v533
        %v593 = vpop.f32.mrf.mxu0
        %v594 = vadd.f32 %v500, %v593
        %v595 = vpop.f32.mrf.mxu0
        %v596 = vadd.f32 %v500, %v595
        %597 = vmatmul.bf16.gmra.mxu0 %v536
        %v598 = vpop.f32.mrf.mxu0
        %v599 = vadd.f32 %v500, %v598
        %v600 = vpop.f32.mrf.mxu0
        %v601 = vadd.f32 %v500, %v600
        %602 = vmatmul.bf16.gmra.mxu0 %v539
        %v603 = vpop.f32.mrf.mxu0
        %v604 = vadd.f32 %v500, %v603
        %v605 = vpop.f32.mrf.mxu0
        %v606 = vadd.f32 %v500, %v605
        %607 = vmatmul.bf16.gmra.mxu0 %v542
        %v608 = vpop.f32.mrf.mxu0
        %v609 = vadd.f32 %v500, %v608
        %v610 = vpop.f32.mrf.mxu0
        %v611 = vadd.f32 %v500, %v610
        %612 = vmatmul.bf16.gmra.mxu0 %v545
        %v613 = vpop.f32.mrf.mxu0
        %v614 = vadd.f32 %v500, %v613
        %v615 = vpop.f32.mrf.mxu0
        %v616 = vadd.f32 %v500, %v615
        %617 = vmatmul.bf16.gmra.mxu0 %v548
        %v618 = vpop.f32.mrf.mxu0
        %v619 = vadd.f32 %v500, %v618
        %v620 = vpop.f32.mrf.mxu0
        %v621 = vadd.f32 %v500, %v620
        %622 = vmatmul.bf16.gmra.mxu0 %v551
        %v623 = vpop.f32.mrf.mxu0
        %v624 = vadd.f32 %v500, %v623
        %v625 = vpop.f32.mrf.mxu0
        %v626 = vadd.f32 %v500, %v625
        %627 = vmatmul.bf16.gmra.mxu0 %v554
        %v628 = vpop.f32.mrf.mxu0
        %v629 = vadd.f32 %v500, %v628
        %v630 = vpop.f32.mrf.mxu0
        %v631 = vadd.f32 %v500, %v630
        %632 = vmatmul.bf16.gmra.mxu0 %v557
        %v633 = vpop.f32.mrf.mxu0
        %v634 = vadd.f32 %v500, %v633
        %v635 = vpop.f32.mrf.mxu0
        %v636 = vadd.f32 %v500, %v635
        %637 = vmatmul.bf16.gmra.mxu0 %v560
        %v638 = vpop.f32.mrf.mxu0
        %v639 = vadd.f32 %v500, %v638
        %v640 = vpop.f32.mrf.mxu0
        %v641 = vadd.f32 %v500, %v640
        %642 = vmatmul.bf16.gmra.mxu0 %v563
        %v643 = vpop.f32.mrf.mxu0
        %v644 = vadd.f32 %v500, %v643
        %v645 = vpop.f32.mrf.mxu0
        %v646 = vadd.f32 %v500, %v645
        %647 = vmatmul.bf16.gmra.mxu0 %v566
        %v648 = vpop.f32.mrf.mxu0
        %v649 = vadd.f32 %v500, %v648
        %v650 = vpop.f32.mrf.mxu0
        %v651 = vadd.f32 %v500, %v650
        %652 = vmatmul.bf16.gmra.mxu0 %v569
        %v653 = vpop.f32.mrf.mxu0
        %v654 = vadd.f32 %v500, %v653
        %v655 = vpop.f32.mrf.mxu0
        %v656 = vadd.f32 %v500, %v655
        %657 = vmatmul.bf16.gmra.mxu0 %v572
        %v658 = vpop.f32.mrf.mxu0
        %v659 = vadd.f32 %v500, %v658
        %v660 = vpop.f32.mrf.mxu0
        %v661 = vadd.f32 %v500, %v660
        %662 = vdwg.mxu0
        %v663 = vmax.f32 %v584, 0.0
        %v664 = vmax.f32 %v586, 0.0
        %v665 = vmax.f32 %v589, 0.0
        %v666 = vmax.f32 %v591, 0.0
        %v667 = vmax.f32 %v594, 0.0
        %v668 = vmax.f32 %v596, 0.0
        %v669 = vmax.f32 %v599, 0.0
        %v670 = vmax.f32 %v601, 0.0
        %v671 = vmax.f32 %v604, 0.0
        %v672 = vmax.f32 %v606, 0.0
        %v673 = vmax.f32 %v609, 0.0
        %v674 = vmax.f32 %v611, 0.0
        %v675 = vmax.f32 %v614, 0.0
        %v676 = vmax.f32 %v616, 0.0
        %v677 = vmax.f32 %v619, 0.0
        %v678 = vmax.f32 %v621, 0.0
        %v679 = vmax.f32 %v624, 0.0
        %v680 = vmax.f32 %v626, 0.0
        %v681 = vmax.f32 %v629, 0.0
        %v682 = vmax.f32 %v631, 0.0
        %v683 = vmax.f32 %v634, 0.0
        %v684 = vmax.f32 %v636, 0.0
        %v685 = vmax.f32 %v639, 0.0
        %v686 = vmax.f32 %v641, 0.0
        %v687 = vmax.f32 %v644, 0.0
        %v688 = vmax.f32 %v646, 0.0
        %v689 = vmax.f32 %v649, 0.0
        %v690 = vmax.f32 %v651, 0.0
        %v691 = vmax.f32 %v654, 0.0
        %v692 = vmax.f32 %v656, 0.0
        %v693 = vmax.f32 %v659, 0.0
        %v694 = vmax.f32 %v661, 0.0
        %v695 = vpack.c.bf16 %v664, %v663
        %v696 = vpack.c.bf16 %v666, %v665
        %v697 = vpack.c.bf16 %v668, %v667
        %v698 = vpack.c.bf16 %v670, %v669
        %v699 = vpack.c.bf16 %v672, %v671
        %v700 = vpack.c.bf16 %v674, %v673
        %v701 = vpack.c.bf16 %v676, %v675
        %v702 = vpack.c.bf16 %v678, %v677
        %v703 = vpack.c.bf16 %v680, %v679
        %v704 = vpack.c.bf16 %v682, %v681
        %v705 = vpack.c.bf16 %v684, %v683
        %v706 = vpack.c.bf16 %v686, %v685
        %v707 = vpack.c.bf16 %v688, %v687
        %v708 = vpack.c.bf16 %v690, %v689
        %v709 = vpack.c.bf16 %v692, %v691
        %v710 = vpack.c.bf16 %v694, %v693
        %712 = vset.pattern.permute.xlu0 0
        %713 = vperm.xlu0 %712, %v218
        %v714 = vpop.permute.xlu0 %713
        %v717 = vsel %vm525, %v217, 0
        %v720 = vsel %vm525, %v695, 0
        %v723 = vsel %vm525, %v696, 0
        %v726 = vsel %vm525, %v697, 0
        %v729 = vsel %vm525, %v698, 0
        %v732 = vsel %vm525, %v699, 0
        %v735 = vsel %vm525, %v700, 0
        %v738 = vsel %vm525, %v701, 0
        %v741 = vsel %vm525, %v702, 0
        %v744 = vsel %vm525, %v703, 0
        %v747 = vsel %vm525, %v704, 0
        %v750 = vsel %vm525, %v705, 0
        %v753 = vsel %vm525, %v706, 0
        %v756 = vsel %vm525, %v707, 0
        %v759 = vsel %vm525, %v708, 0
        %v762 = vsel %vm525, %v709, 0
        %v765 = vsel %vm525, %v710, 0
        %767 = vmatpush.bf16.xpose.msra.mxu0 %v741
        %768 = vmatpush.bf16.xpose.msra.mxu0 %v738
        %769 = vmatpush.bf16.xpose.msra.mxu0 %v735
        %770 = vmatpush.bf16.xpose.msra.mxu0 %v732
        %771 = vmatpush.bf16.xpose.msra.mxu0 %v729
        %772 = vmatpush.bf16.xpose.msra.mxu0 %v726
        %773 = vmatpush.bf16.xpose.msra.mxu0 %v723
        %774 = vmatpush.bf16.xpose.msra.mxu0 %v720
        %775 = vmatmul.bf16.gmra.mxu0 %v717
        %v776 = vpop.f32.mrf.mxu0
        %v777 = vadd.f32 %v714, %v776
        %v778 = vpop.f32.mrf.mxu0
        %779 = vdwg.mxu0
        %780 = vmatpush.bf16.xpose.msra.mxu0 %v765
        %781 = vmatpush.bf16.xpose.msra.mxu0 %v762
        %782 = vmatpush.bf16.xpose.msra.mxu0 %v759
        %783 = vmatpush.bf16.xpose.msra.mxu0 %v756
        %784 = vmatpush.bf16.xpose.msra.mxu0 %v753
        %785 = vmatpush.bf16.xpose.msra.mxu0 %v750
        %786 = vmatpush.bf16.xpose.msra.mxu0 %v747
        %787 = vmatpush.bf16.xpose.msra.mxu0 %v744
        %788 = vmatmul.bf16.gmra.mxu0 %v717
        %v789 = vpop.f32.mrf.mxu0
        %v790 = vadd.f32 %v714, %v789
        %v791 = vpop.f32.mrf.mxu0
        %792 = vdwg.mxu0
        %v793 = vxor.u32 %v777, 2147483648
        %v794 = vxor.u32 %v790, 2147483648
        %v795 = vmul.f32 %v793, 1.442695
        %v796 = vpow.pop %v795
        %v797 = vmul.f32 %v794, 1.442695
        %v798 = vpow.pop %v797
        %v799 = vadd.f32 %v796, 1.0
        %v800 = vadd.f32 %v798, 1.0
        %v801 = vrcp.pop %v799
        %v802 = vmul.f32 %v799, %v801
        %v803 = vsub.f32 1.0, %v802
        %v804 = vmul.f32 %v801, %v803
        %v805 = vadd.f32 %v801, %v804
        %vm806 = vweird.f32 %v799
        %vm807 = vweird.f32 %v801
        %vm808 = vmor %vm806, %vm807
        %v809 = vsel %vm808, %v801, %v805
        %v810 = vand.u32 2147483647, %v799
        %vm811 = vcmp.eq.f32.partialorder %v810, 8.507059e+37
        %v812 = vand.u32 %v799, 2147483648
        %v813 = vor.u32 1.1754944e-38, %v812
        %v814 = vsel %vm811, %v813, %v809
        %v815 = vmul.f32 1.0, %v814
        %v816 = vrcp.pop %v800
        %v817 = vmul.f32 %v800, %v816
        %v818 = vsub.f32 1.0, %v817
        %v819 = vmul.f32 %v816, %v818
        %v820 = vadd.f32 %v816, %v819
        %vm821 = vweird.f32 %v800
        %vm822 = vweird.f32 %v816
        %vm823 = vmor %vm821, %vm822
        %v824 = vsel %vm823, %v816, %v820
        %v825 = vand.u32 2147483647, %v800
        %vm826 = vcmp.eq.f32.partialorder %v825, 8.507059e+37
        %v827 = vand.u32 %v800, 2147483648
        %v828 = vor.u32 1.1754944e-38, %v827
        %v829 = vsel %vm826, %v828, %v824
        %v830 = vmul.f32 1.0, %v829
        %v833 = vrot.slane %v830, 6
        %vm834 = vcmask 1041408
        %v835 = vsel %vm834, %v815, %v833
        %837 = vst [vmem:[%s164] sm:$0xf] %v835
        %s838 = sand.u32 %s93, 1
        %s839 = scalar_lea.sflag [#allocation3], %s838
        %s840 = sand.u32 %s93, 1
        %s841 = smul.addr %s840, 4
        %s842 = scalar_lea.vmem [#allocation2], %s841
        // Predicated region
        $region33: #{tpu_custom_call.1} parent=31 // pred_check
          %p843 = pneg %p103
        $region34: #{tpu_custom_call.1} parent=31 // pred_check_branch
          %845 = sbr.rel (%p843) target = $region36
        $region35: #{tpu_custom_call.1} parent=31 // pred_region
          %s846 = smul.u32 2, %s17
          %848 = vsyncadd %s839, 0
          %s849 = smul.addr %s846, 2
          %s850 = scalar_lea.hbm %s3, %s849
          %s852 = sshll.u32 %s842, 4
          %s853 = int_to_ptr.vmem [resolvable:$true] %s852
          %s854 = sshll.u32 %s850, 4
          %s855 = int_to_ptr.hbm [resolvable:$true] %s854
          %857 = dma.vmem_to_hbm [thread:$0]  %s853, 64, %s855, %s839
        $region36: #{tpu_custom_call.1} parent=31 // pred_fallthru
          _
      $region32: #{tpu_custom_call.1} parent=5 // pred_fallthru
        _
      %p858 = scmp.le.s32.totalorder 2, %s12
      // Predicated region
      $region37: #{tpu_custom_call.1} parent=5 // pred_check
        %p859 = pneg %p858
      $region38: #{tpu_custom_call.1} parent=5 // pred_check_branch
        %861 = sbr.rel (%p859) target = $region40
      $region39: #{tpu_custom_call.1} parent=5 // pred_region
        %s862 = ssub.s32 %s12, 2
        // Predicated region
        $region41: #{tpu_custom_call.1} parent=39 // pred_check
          %p863 = pneg %p109
        $region42: #{tpu_custom_call.1} parent=39 // pred_check_branch
          %865 = sbr.rel (%p863) target = $region44
        $region43: #{tpu_custom_call.1} parent=39 // pred_region
          %s866 = sand.u32 %s94, 1
          %s867 = scalar_lea.sflag [#allocation3], %s866
          %s868 = sand.u32 %s94, 1
          %s869 = smul.addr %s868, 4
          %s870 = scalar_lea.vmem [#allocation2], %s869
          %872 = dma.done %s867, 64
        $region44: #{tpu_custom_call.1} parent=39 // pred_fallthru
          _
      $region40: #{tpu_custom_call.1} parent=5 // pred_fallthru
        _
    $region6: #{tpu_custom_call.1} parent=1 // loop_footer
      %s16 = sadd.s32 1, %s12
    $region7: #{tpu_custom_call.1} parent=1 // loop_footer_branch
      %11 = sbr.rel target = $region3
    $region8: #{tpu_custom_call.1} parent=1 // loop_exit
      _
    %873 = vsyncpa [#allocation3], 1
    %s874 = scalar_lea.sflag [#allocation3], 1
    %875 = vsyncpa %s874, 1

</llo_original>
